<compile_context>
chip_gen: v7x
topology: tpu7x:2x2x1
jax: 0.10.0
libtpu: 0.0.40
codegen_flags: <defaults>
</compile_context>

<pallas_src>
import functools

import numpy as np
import jax
import jax.numpy as jnp
from jax.experimental import pallas as pl
from jax.experimental.pallas import tpu as pltpu


OUT_PAD = 128  # lane-dense logits width inside the kernel


def net7_kernel(x_ref, a_ref, w1_ref, b1_ref, w2_ref, b2_ref, o_ref, *, num_valid):
    # GCNConv (reassociated): (A_hat @ X) @ W1 + b1
    ax = jnp.dot(a_ref[...], x_ref[...], preferred_element_type=jnp.float32)
    h = jnp.dot(ax, w1_ref[...], preferred_element_type=jnp.float32) + b1_ref[...]
    # ReLU
    h = jnp.maximum(h, 0.0)
    # BatchNorm1d(HID): training-mode batch statistics (biased variance), eps=1e-5.
    # The affine gamma/beta are folded into w2_ref/b2_ref by the wrapper.
    mean = jnp.mean(h, axis=0, keepdims=True)
    d = h - mean
    var = jnp.mean(d * d, axis=0, keepdims=True)
    hn = d * jax.lax.rsqrt(var + 1e-5)
    # Linear(HID -> OUT), padded to 128 output lanes (padding columns of W2/b2 are 0).
    z = jnp.dot(hn, w2_ref[...], preferred_element_type=jnp.float32) + b2_ref[...]
    # log_softmax over the first `num_valid` classes only (padded lanes masked out).
    col = jax.lax.broadcasted_iota(jnp.int32, z.shape, 1)
    valid = col < num_valid
    m = jnp.max(jnp.where(valid, z, -jnp.inf), axis=1, keepdims=True)
    s = jnp.sum(jnp.where(valid, jnp.exp(z - m), 0.0), axis=1, keepdims=True)
    o_ref[...] = (z - m - jnp.log(s)).astype(o_ref.dtype)


def net7_forward(x, a_hat, w1, b1, gamma, beta, w2, b2):
    """Runs Net7.forward on one graph ([N,F], [N,N]) or a batch ([B,N,F], [B,N,N])."""
    single = x.ndim == 2
    if single:
        x = x[None]
        a_hat = a_hat[None]
    b_graphs, n, f_in = x.shape
    hid = w1.shape[1]
    c_out = w2.shape[1]

    # Fold BatchNorm affine into the Linear layer:
    #   (hn*gamma + beta) @ W2 + b2 == hn @ (gamma[:,None]*W2) + (beta @ W2 + b2)
    w2_fold = gamma[:, None] * w2
    b2_fold = beta @ w2 + b2
    # Pad Linear output to 128 lanes (lane-dense stores); padding columns are zero
    # and are masked out of the in-kernel log_softmax.
    w2_pad = jnp.zeros((hid, OUT_PAD), jnp.float32).at[:, :c_out].set(w2_fold)
    b2_pad = jnp.zeros((1, OUT_PAD), jnp.float32).at[:, :c_out].set(b2_fold)
    b1_row = b1.reshape(1, hid)

    cost = pl.CostEstimate(
        flops=2 * b_graphs * (n * n * f_in + n * f_in * hid + n * hid * OUT_PAD),
        transcendentals=b_graphs * (n * OUT_PAD + n + hid),   # exp + log + rsqrt
        bytes_accessed=4 * (b_graphs * (n * f_in + n * n + n * OUT_PAD)
                            + f_in * hid + hid + hid * OUT_PAD + OUT_PAD),
    )

    kernel = functools.partial(net7_kernel, num_valid=c_out)

    out = pl.pallas_call(
        kernel,
        out_shape=jax.ShapeDtypeStruct((b_graphs, n, OUT_PAD), jnp.float32),
        grid=(b_graphs,),
        in_specs=[
            pl.BlockSpec((pl.Squeezed(), n, f_in), lambda b: (b, 0, 0)),     # x
            pl.BlockSpec((pl.Squeezed(), n, n), lambda b: (b, 0, 0)),        # A_hat
            pl.BlockSpec((f_in, hid), lambda b: (0, 0)),                     # W1 (resident)
            pl.BlockSpec((1, hid), lambda b: (0, 0)),                        # b1 (resident)
            pl.BlockSpec((hid, OUT_PAD), lambda b: (0, 0)),                  # W2' (resident)
            pl.BlockSpec((1, OUT_PAD), lambda b: (0, 0)),                    # b2' (resident)
        ],
        out_specs=pl.BlockSpec((pl.Squeezed(), n, OUT_PAD), lambda b: (b, 0, 0)),
        compiler_params=pltpu.CompilerParams(dimension_semantics=("parallel",)),
        cost_estimate=cost,
    )(x, a_hat, w1, b1_row, w2_pad, b2_pad)

    logits = out[..., :c_out]
    return logits[0] if single else logits


def gcn_norm_dense(edge_index, num_nodes):
    """Dense D^{-1/2}(A+I)D^{-1/2}; A[i, j] = 1 for each edge j -> i (PyG GCNConv)."""
    src = edge_index[0]
    dst = edge_index[1]
    a = jnp.zeros((num_nodes, num_nodes), jnp.float32).at[dst, src].add(1.0)
    a = a + jnp.eye(num_nodes, dtype=jnp.float32)
    deg = jnp.sum(a, axis=1)
    dinv = jax.lax.rsqrt(deg)
    return dinv[:, None] * a * dinv[None, :]


def net7_reference(x, a_hat, w1, b1, gamma, beta, w2, b2):
    """Pure-JAX reference (PyTorch semantics, training-mode BN)."""
    h = a_hat @ (x @ w1) + b1
    h = jnp.maximum(h, 0.0)
    mean = jnp.mean(h, axis=0, keepdims=True)
    var = jnp.mean((h - mean) ** 2, axis=0, keepdims=True)
    hn = (h - mean) * jax.lax.rsqrt(var + 1e-5) * gamma + beta
    z = hn @ w2 + b2
    return jax.nn.log_softmax(z, axis=1)


if __name__ == "__main__":
    B, N, F_IN, HID, OUT = 4, 32, 16, 256, 11

    key = jax.random.PRNGKey(0)
    kx, kw1, kw2, kb2 = jax.random.split(key, 4)

    # Synthetic node features for B independent graphs.
    x_b = jax.random.normal(kx, (B, N, F_IN), jnp.float32)

    # Deterministic bidirectional ring graphs with per-graph skip distance.
    idx = np.arange(N)
    a_list = []
    for g in range(B):
        skip = g + 1
        src = np.concatenate([idx, (idx + skip) % N])
        dst = np.concatenate([(idx + skip) % N, idx])
        ei = jnp.asarray(np.stack([src, dst]), jnp.int32)
        a_list.append(gcn_norm_dense(ei, N))
    a_b = jnp.stack(a_list)

    # GCNConv params: glorot weight, zero bias.
    lim1 = float(np.sqrt(6.0 / (F_IN + HID)))
    w1 = jax.random.uniform(kw1, (F_IN, HID), jnp.float32, -lim1, lim1)
    b1 = jnp.zeros((HID,), jnp.float32)
    # BatchNorm1d(256) affine params.
    gamma = jnp.ones((HID,), jnp.float32)
    beta = jnp.zeros((HID,), jnp.float32)
    # Linear(256, 11) params (PyTorch default uniform(-1/sqrt(fan_in), ...)).
    lim2 = float(np.sqrt(1.0 / HID))
    w2 = jax.random.uniform(kw2, (HID, OUT), jnp.float32, -lim2, lim2)
    b2 = jax.random.uniform(kb2, (OUT,), jnp.float32, -lim2, lim2)

    out = net7_forward(x_b, a_b, w1, b1, gamma, beta, w2, b2)
    jax.block_until_ready(out)
    assert out.shape == (B, N, OUT) and out.dtype == jnp.float32

    # Correctness check against a pure-JAX reference (per-graph forward calls).
    ref = jnp.stack([net7_reference(x_b[g], a_b[g], w1, b1, gamma, beta, w2, b2)
                     for g in range(B)])
    np.testing.assert_allclose(np.asarray(out), np.asarray(ref), rtol=1e-4, atol=1e-4)

    # Single-graph path still works.
    out1 = net7_forward(x_b[0], a_b[0], w1, b1, gamma, beta, w2, b2)
    jax.block_until_ready(out1)
    assert out1.shape == (N, OUT)

    print("KERNEL_OK")
</pallas_src>

<mosaic_0001>
module attributes {stable_mosaic.version = 11 : i64} {
  func.func @net7_kernel(%arg0: i32, %arg1: memref<1x32x16xf32, #tpu.memory_space<vmem>>, %arg2: memref<1x32x32xf32, #tpu.memory_space<vmem>>, %arg3: memref<16x256xf32, #tpu.memory_space<vmem>>, %arg4: memref<1x256xf32, #tpu.memory_space<vmem>>, %arg5: memref<256x128xf32, #tpu.memory_space<vmem>>, %arg6: memref<1x128xf32, #tpu.memory_space<vmem>>, %arg7: memref<1x32x128xf32, #tpu.memory_space<vmem>>) attributes {dimension_semantics = [#tpu.dimension_semantics<parallel>], iteration_bounds = array<i64: 4>, scalar_prefetch = 0 : i64, scratch_operands = 0 : i64, tpu.core_type = #tpu.core_type<tc>, window_params = [{transform_indices = @transform_0, window_bounds = array<i64: 1, 32, 16>}, {transform_indices = @transform_1, window_bounds = array<i64: 1, 32, 32>}, {pipeline_mode = #tpu.pipeline_mode<synchronous>, transform_indices = @transform_2, window_bounds = array<i64: 16, 256>}, {pipeline_mode = #tpu.pipeline_mode<synchronous>, transform_indices = @transform_3, window_bounds = array<i64: 1, 256>}, {pipeline_mode = #tpu.pipeline_mode<synchronous>, transform_indices = @transform_4, window_bounds = array<i64: 256, 128>}, {pipeline_mode = #tpu.pipeline_mode<synchronous>, transform_indices = @transform_5, window_bounds = array<i64: 1, 128>}, {transform_indices = @transform_6, window_bounds = array<i64: 1, 32, 128>}]} {
    %c0 = arith.constant 0 : index
    %c0_0 = arith.constant 0 : index
    %c0_1 = arith.constant 0 : index
    %0 = vector.load %arg2[%c0, %c0_0, %c0_1] : memref<1x32x32xf32, #tpu.memory_space<vmem>>, vector<1x32x32xf32>
    %1 = vector.shape_cast %0 : vector<1x32x32xf32> to vector<32x32xf32>
    %c0_2 = arith.constant 0 : index
    %c0_3 = arith.constant 0 : index
    %c0_4 = arith.constant 0 : index
    %2 = vector.load %arg1[%c0_2, %c0_3, %c0_4] : memref<1x32x16xf32, #tpu.memory_space<vmem>>, vector<1x32x16xf32>
    %3 = vector.shape_cast %2 : vector<1x32x16xf32> to vector<32x16xf32>
    %cst = arith.constant dense<0.000000e+00> : vector<32x16xf32>
    %4 = tpu.matmul %1, %3, %cst {dimension_numbers = #tpu.dot_dimension_numbers<[1], [0], [0], [1], [0, 0, 1, 1], [], []>} : vector<32x32xf32>, vector<32x16xf32>, vector<32x16xf32> -> vector<32x16xf32>
    %c0_5 = arith.constant 0 : index
    %c0_6 = arith.constant 0 : index
    %5 = vector.load %arg3[%c0_5, %c0_6] : memref<16x256xf32, #tpu.memory_space<vmem>>, vector<16x256xf32>
    %cst_7 = arith.constant dense<0.000000e+00> : vector<32x256xf32>
    %6 = tpu.matmul %4, %5, %cst_7 {dimension_numbers = #tpu.dot_dimension_numbers<[1], [0], [0], [1], [0, 0, 1, 1], [], []>} : vector<32x16xf32>, vector<16x256xf32>, vector<32x256xf32> -> vector<32x256xf32>
    %c0_8 = arith.constant 0 : index
    %c0_9 = arith.constant 0 : index
    %7 = vector.load %arg4[%c0_8, %c0_9] : memref<1x256xf32, #tpu.memory_space<vmem>>, vector<1x256xf32>
    %8 = vector.broadcast %7 : vector<1x256xf32> to vector<32x256xf32>
    %9 = arith.addf %6, %8 : vector<32x256xf32>
    %cst_10 = arith.constant 0.000000e+00 : f32
    %10 = vector.broadcast %cst_10 : f32 to vector<32x256xf32>
    %11 = arith.maximumf %9, %10 : vector<32x256xf32>
    %cst_11 = arith.constant dense<0.000000e+00> : vector<256xf32>
    %12 = vector.multi_reduction <add>, %11, %cst_11 [0] : vector<32x256xf32> to vector<256xf32>
    %13 = vector.shape_cast %12 : vector<256xf32> to vector<1x256xf32>
    %cst_12 = arith.constant 3.200000e+01 : f32
    %14 = vector.broadcast %cst_12 : f32 to vector<1x256xf32>
    %15 = arith.divf %13, %14 : vector<1x256xf32>
    %16 = vector.broadcast %15 : vector<1x256xf32> to vector<32x256xf32>
    %17 = arith.subf %11, %16 : vector<32x256xf32>
    %18 = arith.mulf %17, %17 : vector<32x256xf32>
    %cst_13 = arith.constant dense<0.000000e+00> : vector<256xf32>
    %19 = vector.multi_reduction <add>, %18, %cst_13 [0] : vector<32x256xf32> to vector<256xf32>
    %20 = vector.shape_cast %19 : vector<256xf32> to vector<1x256xf32>
    %cst_14 = arith.constant 3.200000e+01 : f32
    %21 = vector.broadcast %cst_14 : f32 to vector<1x256xf32>
    %22 = arith.divf %20, %21 : vector<1x256xf32>
    %cst_15 = arith.constant 9.99999974E-6 : f32
    %23 = vector.broadcast %cst_15 : f32 to vector<1x256xf32>
    %24 = arith.addf %22, %23 : vector<1x256xf32>
    %25 = math.rsqrt %24 : vector<1x256xf32>
    %26 = vector.broadcast %25 : vector<1x256xf32> to vector<32x256xf32>
    %27 = arith.mulf %17, %26 : vector<32x256xf32>
    %c0_16 = arith.constant 0 : index
    %c0_17 = arith.constant 0 : index
    %28 = vector.load %arg5[%c0_16, %c0_17] : memref<256x128xf32, #tpu.memory_space<vmem>>, vector<256x128xf32>
    %cst_18 = arith.constant dense<0.000000e+00> : vector<32x128xf32>
    %29 = tpu.matmul %27, %28, %cst_18 {dimension_numbers = #tpu.dot_dimension_numbers<[1], [0], [0], [1], [0, 0, 1, 1], [], []>} : vector<32x256xf32>, vector<256x128xf32>, vector<32x128xf32> -> vector<32x128xf32>
    %c0_19 = arith.constant 0 : index
    %c0_20 = arith.constant 0 : index
    %30 = vector.load %arg6[%c0_19, %c0_20] : memref<1x128xf32, #tpu.memory_space<vmem>>, vector<1x128xf32>
    %31 = vector.broadcast %30 : vector<1x128xf32> to vector<32x128xf32>
    %32 = arith.addf %29, %31 : vector<32x128xf32>
    %33 = tpu.iota {dimensions = array<i32: 1>} : vector<32x128xi32>
    %c11_i32 = arith.constant 11 : i32
    %34 = vector.broadcast %c11_i32 : i32 to vector<32x128xi32>
    %35 = arith.cmpi slt, %33, %34 : vector<32x128xi32>
    %cst_21 = arith.constant 0xFF800000 : f32
    %36 = vector.broadcast %cst_21 : f32 to vector<32x128xf32>
    %37 = arith.select %35, %32, %36 : vector<32x128xi1>, vector<32x128xf32>
    %cst_22 = arith.constant dense<0xFF800000> : vector<32xf32>
    %38 = vector.multi_reduction <maximumf>, %37, %cst_22 [1] : vector<32x128xf32> to vector<32xf32>
    %39 = vector.shape_cast %38 : vector<32xf32> to vector<32x1xf32>
    %40 = vector.broadcast %39 : vector<32x1xf32> to vector<32x128xf32>
    %41 = arith.subf %32, %40 : vector<32x128xf32>
    %42 = math.exp %41 : vector<32x128xf32>
    %cst_23 = arith.constant 0.000000e+00 : f32
    %43 = vector.broadcast %cst_23 : f32 to vector<32x128xf32>
    %44 = arith.select %35, %42, %43 : vector<32x128xi1>, vector<32x128xf32>
    %cst_24 = arith.constant dense<0.000000e+00> : vector<32xf32>
    %45 = vector.multi_reduction <add>, %44, %cst_24 [1] : vector<32x128xf32> to vector<32xf32>
    %46 = vector.shape_cast %45 : vector<32xf32> to vector<32x1xf32>
    %47 = vector.broadcast %39 : vector<32x1xf32> to vector<32x128xf32>
    %48 = arith.subf %32, %47 : vector<32x128xf32>
    %49 = math.log %46 : vector<32x1xf32>
    %50 = vector.broadcast %49 : vector<32x1xf32> to vector<32x128xf32>
    %51 = arith.subf %48, %50 : vector<32x128xf32>
    %c0_25 = arith.constant 0 : index
    %c0_26 = arith.constant 0 : index
    %c0_27 = arith.constant 0 : index
    %52 = vector.load %arg7[%c0_25, %c0_26, %c0_27] : memref<1x32x128xf32, #tpu.memory_space<vmem>>, vector<1x32x128xf32>
    %53 = vector.shape_cast %52 : vector<1x32x128xf32> to vector<32x128xf32>
    %54 = vector.shape_cast %51 : vector<32x128xf32> to vector<1x32x128xf32>
    tpu.vector_store %arg7[%c0_25, %c0_26, %c0_27], %54 {strides = array<i32>} : memref<1x32x128xf32, #tpu.memory_space<vmem>>, vector<1x32x128xf32>,
    return
  }
  func.func @transform_0(%arg0: i32) -> (i32, i32, i32) {
    %c0_i32 = arith.constant 0 : i32
    %c0_i32_0 = arith.constant 0 : i32
    %c0_i32_1 = arith.constant 0 : i32
    return %arg0, %c0_i32, %c0_i32_0 : i32, i32, i32
  }
  func.func @transform_1(%arg0: i32) -> (i32, i32, i32) {
    %c0_i32 = arith.constant 0 : i32
    %c0_i32_0 = arith.constant 0 : i32
    %c0_i32_1 = arith.constant 0 : i32
    return %arg0, %c0_i32, %c0_i32_0 : i32, i32, i32
  }
  func.func @transform_2(%arg0: i32) -> (i32, i32) {
    %c0_i32 = arith.constant 0 : i32
    %c0_i32_0 = arith.constant 0 : i32
    %c0_i32_1 = arith.constant 0 : i32
    return %c0_i32, %c0_i32_0 : i32, i32
  }
  func.func @transform_3(%arg0: i32) -> (i32, i32) {
    %c0_i32 = arith.constant 0 : i32
    %c0_i32_0 = arith.constant 0 : i32
    %c0_i32_1 = arith.constant 0 : i32
    return %c0_i32, %c0_i32_0 : i32, i32
  }
  func.func @transform_4(%arg0: i32) -> (i32, i32) {
    %c0_i32 = arith.constant 0 : i32
    %c0_i32_0 = arith.constant 0 : i32
    %c0_i32_1 = arith.constant 0 : i32
    return %c0_i32, %c0_i32_0 : i32, i32
  }
  func.func @transform_5(%arg0: i32) -> (i32, i32) {
    %c0_i32 = arith.constant 0 : i32
    %c0_i32_0 = arith.constant 0 : i32
    %c0_i32_1 = arith.constant 0 : i32
    return %c0_i32, %c0_i32_0 : i32, i32
  }
  func.func @transform_6(%arg0: i32) -> (i32, i32, i32) {
    %c0_i32 = arith.constant 0 : i32
    %c0_i32_0 = arith.constant 0 : i32
    %c0_i32_1 = arith.constant 0 : i32
    return %arg0, %c0_i32, %c0_i32_0 : i32, i32, i32
  }
}

</mosaic_0001>

<llo_original>
// kernel: tpu_custom_call.1
$region0: #{tpu_custom_call.1}
  #allocation0 [shape = 'u32[]', space=smem, size = 0x4, offset = 0x4, fixed_abs, tag = 'smem constant byte address 0x4 - core index']
  #allocation1 [shape = 'u32[144,128]{1,0:T(1,128)}', space=vmem, size = 0x12000, scoped, tag = 'internal scratch']
  %s0 = inlined_call_operand.vmem [shape: f32[4,32,16], index: 0, kind: input, shape index: {}]
  %s1 = inlined_call_operand.vmem [shape: f32[4,32,32], index: 1, kind: input, shape index: {}]
  %s2 = inlined_call_operand.vmem [shape: f32[16,256], index: 2, kind: input, shape index: {}]
  %s3 = inlined_call_operand.vmem [shape: f32[1,256], index: 3, kind: input, shape index: {}]
  %s4 = inlined_call_operand.hbm [shape: f32[256,128], index: 4, kind: input, shape index: {}]
  %s5 = inlined_call_operand.vmem [shape: f32[1,128], index: 5, kind: input, shape index: {}]
  %s6 = inlined_call_operand.hbm [shape: f32[4,32,128], index: 6, kind: output, shape index: {}]
  %s7 = sld [smem:[#allocation0]]
  $region61: #{tpu_custom_call.1} parent=0
    _
  %s9 = ssub.s32 1, %s7
  %s10 = scalar_select 0, %s9, %s7
  $region1: #{tpu_custom_call.1} parent=0
    #allocation2 [shape = 'u8[131072]{0}', space=vmem, size = 0x20000, scoped, tag = 'input window, operand 4, single buffered']
    #allocation3 [shape = 's32[2]{0}', space=sflag, size = 0x8, scoped, tag = 'scoped memory for tpu_custom_call.1']
    #allocation4 [shape = 's32[2]{0}', space=sflag, size = 0x8, scoped, tag = 'scoped memory for tpu_custom_call.1']
    #allocation5 [shape = 'u8[32768]{0}', space=vmem, size = 0x8000, scoped, tag = 'output window, operand 0']
    %11 = vsyncpa [#allocation3], 0
    %12 = vsyncpa [#allocation4], 0
    %s13 = scalar_lea.sflag [#allocation4], 1
    %14 = vsyncpa %s13, 0
    loop: start=0, step=1, limit=6
    $region2: #{tpu_custom_call.1} parent=1 // loop_pre_header
      _
    $region3: #{tpu_custom_call.1} parent=1 // loop_header
      %s16 = sphi 0, %s20
      %p17 = scmp.ge.s32.totalorder %s16, 6
      %s26 = sphi 0, %s28
      %s29 = sphi 0, %s26
      %s30 = sphi 0, %s29
      %s46 = sphi 0, %s30
      %s52 = sphi 0, %s54
      %s55 = sphi 0, %s52
      %s56 = sphi 0, %s55
      %s72 = sphi 0, %s56
      %s76 = sphi 0, %s76
      %s78 = sphi 0, %s76
      %s79 = sphi 0, %s78
      %s93 = sphi 0, %s79
      %s97 = sphi 0, %s97
      %s99 = sphi 0, %s97
      %s100 = sphi 0, %s99
      %s114 = sphi 0, %s100
      %s118 = sphi 0, %s118
      %s120 = sphi 0, %s118
      %s121 = sphi 0, %s120
      %s135 = sphi 0, %s121
      %s139 = sphi 0, %s139
      %s141 = sphi 0, %s139
      %s142 = sphi 0, %s141
      %s156 = sphi 0, %s142
      %s162 = sphi 0, %s164
      %s165 = sphi 0, %s162
      %s166 = sphi 0, %s165
      %s182 = sphi 0, %s166
    $region4: #{tpu_custom_call.1} parent=1 // loop_header_branch
      %19 = sbr.rel (%p17) target = $region8
    $region5: #{tpu_custom_call.1} parent=1 // loop_body
      %s21 = ssub.s32 %s16, 1
      %s22 = ssub.s32 %s16, 2
      %s23 = sadd.s32 %s16, 1
      %s24 = ssub.s32 %s16, %s23
      %p25 = scmp.eq.s32.totalorder %s24, 0
      %s27 = sadd.s32 %s26, 1
      %s28 = scalar_select %p25, %s26, %s27
      %p31 = pneg %p25
      %p32 = scmp.eq.s32.totalorder %s16, 3
      %p33 = por %p31, %p32
      %p34 = scmp.ne.s32.totalorder %s26, %s29
      %p35 = scmp.eq.s32.totalorder %s16, 0
      %p36 = por %p34, %p35
      %p37 = scmp.ne.s32.totalorder %s26, %s29
      %p38 = scmp.eq.s32.totalorder %s21, 3
      %p39 = por %p37, %p38
      %p40 = scmp.ne.s32.totalorder %s29, %s30
      %p41 = scmp.eq.s32.totalorder %s21, 0
      %p42 = por %p40, %p41
      %p43 = scmp.ne.s32.totalorder %s29, %s30
      %p44 = scmp.eq.s32.totalorder %s22, 3
      %p45 = por %p43, %p44
      %p47 = scmp.ne.s32.totalorder %s30, %s46
      %p48 = scmp.eq.s32.totalorder %s22, 0
      %p49 = por %p47, %p48
      %s50 = ssub.s32 %s16, %s23
      %p51 = scmp.eq.s32.totalorder %s50, 0
      %s53 = sadd.s32 %s52, 1
      %s54 = scalar_select %p51, %s52, %s53
      %p57 = pneg %p51
      %p58 = scmp.eq.s32.totalorder %s16, 3
      %p59 = por %p57, %p58
      %p60 = scmp.ne.s32.totalorder %s52, %s55
      %p61 = scmp.eq.s32.totalorder %s16, 0
      %p62 = por %p60, %p61
      %p63 = scmp.ne.s32.totalorder %s52, %s55
      %p64 = scmp.eq.s32.totalorder %s21, 3
      %p65 = por %p63, %p64
      %p66 = scmp.ne.s32.totalorder %s55, %s56
      %p67 = scmp.eq.s32.totalorder %s21, 0
      %p68 = por %p66, %p67
      %p69 = scmp.ne.s32.totalorder %s55, %s56
      %p70 = scmp.eq.s32.totalorder %s22, 3
      %p71 = por %p69, %p70
      %p73 = scmp.ne.s32.totalorder %s56, %s72
      %p74 = scmp.eq.s32.totalorder %s22, 0
      %p75 = por %p73, %p74
      %s77 = sadd.s32 %s76, 1
      %p80 = scmp.eq.s32.totalorder %s16, 3
      %p81 = scmp.ne.s32.totalorder %s76, %s78
      %p82 = scmp.eq.s32.totalorder %s16, 0
      %p83 = por %p81, %p82
      %p84 = scmp.ne.s32.totalorder %s76, %s78
      %p85 = scmp.eq.s32.totalorder %s21, 3
      %p86 = por %p84, %p85
      %p87 = scmp.ne.s32.totalorder %s78, %s79
      %p88 = scmp.eq.s32.totalorder %s21, 0
      %p89 = por %p87, %p88
      %p90 = scmp.ne.s32.totalorder %s78, %s79
      %p91 = scmp.eq.s32.totalorder %s22, 3
      %p92 = por %p90, %p91
      %p94 = scmp.ne.s32.totalorder %s79, %s93
      %p95 = scmp.eq.s32.totalorder %s22, 0
      %p96 = por %p94, %p95
      %s98 = sadd.s32 %s97, 1
      %p101 = scmp.eq.s32.totalorder %s16, 3
      %p102 = scmp.ne.s32.totalorder %s97, %s99
      %p103 = scmp.eq.s32.totalorder %s16, 0
      %p104 = por %p102, %p103
      %p105 = scmp.ne.s32.totalorder %s97, %s99
      %p106 = scmp.eq.s32.totalorder %s21, 3
      %p107 = por %p105, %p106
      %p108 = scmp.ne.s32.totalorder %s99, %s100
      %p109 = scmp.eq.s32.totalorder %s21, 0
      %p110 = por %p108, %p109
      %p111 = scmp.ne.s32.totalorder %s99, %s100
      %p112 = scmp.eq.s32.totalorder %s22, 3
      %p113 = por %p111, %p112
      %p115 = scmp.ne.s32.totalorder %s100, %s114
      %p116 = scmp.eq.s32.totalorder %s22, 0
      %p117 = por %p115, %p116
      %s119 = sadd.s32 %s118, 1
      %p122 = scmp.eq.s32.totalorder %s16, 3
      %p123 = scmp.ne.s32.totalorder %s118, %s120
      %p124 = scmp.eq.s32.totalorder %s16, 0
      %p125 = por %p123, %p124
      %p126 = scmp.ne.s32.totalorder %s118, %s120
      %p127 = scmp.eq.s32.totalorder %s21, 3
      %p128 = por %p126, %p127
      %p129 = scmp.ne.s32.totalorder %s120, %s121
      %p130 = scmp.eq.s32.totalorder %s21, 0
      %p131 = por %p129, %p130
      %p132 = scmp.ne.s32.totalorder %s120, %s121
      %p133 = scmp.eq.s32.totalorder %s22, 3
      %p134 = por %p132, %p133
      %p136 = scmp.ne.s32.totalorder %s121, %s135
      %p137 = scmp.eq.s32.totalorder %s22, 0
      %p138 = por %p136, %p137
      %s140 = sadd.s32 %s139, 1
      %p143 = scmp.eq.s32.totalorder %s16, 3
      %p144 = scmp.ne.s32.totalorder %s139, %s141
      %p145 = scmp.eq.s32.totalorder %s16, 0
      %p146 = por %p144, %p145
      %p147 = scmp.ne.s32.totalorder %s139, %s141
      %p148 = scmp.eq.s32.totalorder %s21, 3
      %p149 = por %p147, %p148
      %p150 = scmp.ne.s32.totalorder %s141, %s142
      %p151 = scmp.eq.s32.totalorder %s21, 0
      %p152 = por %p150, %p151
      %p153 = scmp.ne.s32.totalorder %s141, %s142
      %p154 = scmp.eq.s32.totalorder %s22, 3
      %p155 = por %p153, %p154
      %p157 = scmp.ne.s32.totalorder %s142, %s156
      %p158 = scmp.eq.s32.totalorder %s22, 0
      %p159 = por %p157, %p158
      %s160 = ssub.s32 %s16, %s23
      %p161 = scmp.eq.s32.totalorder %s160, 0
      %s163 = sadd.s32 %s162, 1
      %s164 = scalar_select %p161, %s162, %s163
      %p167 = pneg %p161
      %p168 = scmp.eq.s32.totalorder %s16, 3
      %p169 = por %p167, %p168
      %p170 = scmp.ne.s32.totalorder %s162, %s165
      %p171 = scmp.eq.s32.totalorder %s16, 0
      %p172 = por %p170, %p171
      %p173 = scmp.ne.s32.totalorder %s162, %s165
      %p174 = scmp.eq.s32.totalorder %s21, 3
      %p175 = por %p173, %p174
      %p176 = scmp.ne.s32.totalorder %s165, %s166
      %p177 = scmp.eq.s32.totalorder %s21, 0
      %p178 = por %p176, %p177
      %p179 = scmp.ne.s32.totalorder %s165, %s166
      %p180 = scmp.eq.s32.totalorder %s22, 3
      %p181 = por %p179, %p180
      %p183 = scmp.ne.s32.totalorder %s166, %s182
      %p184 = scmp.eq.s32.totalorder %s22, 0
      %p185 = por %p183, %p184
      %p186 = scmp.le.s32.totalorder 1, %s16
      %p187 = scmp.lt.s32.totalorder %s16, 5
      %p188 = pnand %p186, %p187
      %p189 = pneg %p188
      // Predicated region
      $region9: #{tpu_custom_call.1} parent=5 // pred_check
        _
      $region10: #{tpu_custom_call.1} parent=5 // pred_check_branch
        %191 = sbr.rel (%p188) target = $region12
      $region11: #{tpu_custom_call.1} parent=5 // pred_region
        %s192 = ssub.s32 %s16, 1
        // Predicated region
        $region13: #{tpu_custom_call.1} parent=11 // pred_check
          %p193 = pneg %p89
        $region14: #{tpu_custom_call.1} parent=11 // pred_check_branch
          %195 = sbr.rel (%p193) target = $region16
        $region15: #{tpu_custom_call.1} parent=11 // pred_region
          _
        $region16: #{tpu_custom_call.1} parent=11 // pred_fallthru
          _
        // Predicated region
        $region17: #{tpu_custom_call.1} parent=11 // pred_check
          %p196 = pneg %p110
        $region18: #{tpu_custom_call.1} parent=11 // pred_check_branch
          %198 = sbr.rel (%p196) target = $region20
        $region19: #{tpu_custom_call.1} parent=11 // pred_region
          _
        $region20: #{tpu_custom_call.1} parent=11 // pred_fallthru
          _
        // Predicated region
        $region21: #{tpu_custom_call.1} parent=11 // pred_check
          %p199 = pneg %p131
        $region22: #{tpu_custom_call.1} parent=11 // pred_check_branch
          %201 = sbr.rel (%p199) target = $region24
        $region23: #{tpu_custom_call.1} parent=11 // pred_region
          %s203 = ssub.s32 4096, 4096
          %204 = vsyncadd [#allocation3], %s203
          %s205 = sshll.u32 [#allocation2], 4
          %s206 = int_to_ptr.vmem [resolvable:$true] %s205
          %211 = dma.hbm_to_vmem [thread:$0]  %s4, 4096, %s206, [#allocation3], 128, 128, 8
        $region24: #{tpu_custom_call.1} parent=11 // pred_fallthru
          _
        // Predicated region
        $region25: #{tpu_custom_call.1} parent=11 // pred_check
          %p212 = pneg %p152
        $region26: #{tpu_custom_call.1} parent=11 // pred_check_branch
          %214 = sbr.rel (%p212) target = $region28
        $region27: #{tpu_custom_call.1} parent=11 // pred_region
          _
        $region28: #{tpu_custom_call.1} parent=11 // pred_fallthru
          _
      $region12: #{tpu_custom_call.1} parent=5 // pred_fallthru
        _
      %p215 = scmp.lt.s32.totalorder %s16, 4
      // Predicated region
      $region29: #{tpu_custom_call.1} parent=5 // pred_check
        %p216 = pneg %p215
      $region30: #{tpu_custom_call.1} parent=5 // pred_check_branch
        %218 = sbr.rel (%p216) target = $region32
      $region31: #{tpu_custom_call.1} parent=5 // pred_region
        // Predicated region
        $region33: #{tpu_custom_call.1} parent=31 // pred_check
          %p219 = pneg %p36
        $region34: #{tpu_custom_call.1} parent=31 // pred_check_branch
          %221 = sbr.rel (%p219) target = $region36
        $region35: #{tpu_custom_call.1} parent=31 // pred_region
          %p222 = scmp.lt.s32.totalorder %s16, 3
          %s223 = scalar_select %p222, %s16, 3
          %s224 = smul.addr %s223, 4
          %s225 = smul.addr %s224, 8
          %s226 = scalar_lea.vmem %s0, %s225
        $region36: #{tpu_custom_call.1} parent=31 // pred_fallthru
          _
        // Predicated region
        $region37: #{tpu_custom_call.1} parent=31 // pred_check
          %p227 = pneg %p62
        $region38: #{tpu_custom_call.1} parent=31 // pred_check_branch
          %229 = sbr.rel (%p227) target = $region40
        $region39: #{tpu_custom_call.1} parent=31 // pred_region
          %p230 = scmp.lt.s32.totalorder %s16, 3
          %s231 = scalar_select %p230, %s16, 3
          %s232 = smul.addr %s231, 4
          %s233 = smul.addr %s232, 8
          %s234 = scalar_lea.vmem %s1, %s233
        $region40: #{tpu_custom_call.1} parent=31 // pred_fallthru
          _
      $region32: #{tpu_custom_call.1} parent=5 // pred_fallthru
        _
      %p235 = scmp.le.s32.totalorder 1, %s16
      %p236 = scmp.lt.s32.totalorder %s16, 5
      %p237 = pnand %p235, %p236
      %p238 = pneg %p237
      // Predicated region
      $region41: #{tpu_custom_call.1} parent=5 // pred_check
        _
      $region42: #{tpu_custom_call.1} parent=5 // pred_check_branch
        %240 = sbr.rel (%p237) target = $region44
      $region43: #{tpu_custom_call.1} parent=5 // pred_region
        %s241 = ssub.s32 %s16, 1
        // Predicated region
        $region45: #{tpu_custom_call.1} parent=43 // pred_check
          %p242 = pneg %p131
        $region46: #{tpu_custom_call.1} parent=43 // pred_check_branch
          %244 = sbr.rel (%p242) target = $region48
        $region47: #{tpu_custom_call.1} parent=43 // pred_region
          %245 = dma.done [#allocation3], 4096
        $region48: #{tpu_custom_call.1} parent=43 // pred_fallthru
          _
        %p246 = scmp.lt.s32.totalorder %s21, 3
        %s247 = scalar_select %p246, %s21, 3
        %s248 = smul.addr %s247, 4
        %s249 = smul.addr %s248, 8
        %s250 = scalar_lea.vmem %s0, %s249
        %p251 = pneg %p42
        %p252 = pneg %p39
        %p253 = scmp.lt.s32.totalorder %s21, 3
        %s254 = scalar_select %p253, %s21, 3
        %s255 = smul.addr %s254, 4
        %s256 = smul.addr %s255, 8
        %s257 = scalar_lea.vmem %s1, %s256
        %p258 = pneg %p68
        %p259 = pneg %p65
        %p260 = pneg %p89
        %p261 = pneg %p86
        %p262 = pneg %p110
        %p263 = pneg %p107
        %p264 = pneg %p131
        %p265 = pneg %p128
        %p266 = pneg %p152
        %p267 = pneg %p149
        %p268 = pneg %p178
        %p269 = pneg %p175
        %s270 = sand.u32 %s165, 1
        %s271 = scalar_lea.sflag [#allocation4], %s270
        %s272 = sand.u32 %s165, 1
        %s273 = smul.addr %s272, 32
        %s274 = scalar_lea.vmem [#allocation5], %s273
        %p275 = scmp.lt.s32.totalorder %s21, 3
        %s276 = scalar_select %p275, %s21, 3
        %s277 = smul.addr %s276, 4
        %s278 = smul.addr %s277, 8
        %s279 = scalar_lea.vmem %s0, %s278
        %p280 = scmp.lt.s32.totalorder %s21, 3
        %s281 = scalar_select %p280, %s21, 3
        %s282 = smul.addr %s281, 4
        %s283 = smul.addr %s282, 8
        %s284 = scalar_lea.vmem %s1, %s283
        %v285 = vld [vmem:[%s284] sm:$0xff]
        %v286 = vld [vmem:[%s284 + $0x8] sm:$0xff]
        %v287 = vld [vmem:[%s284 + $0x10] sm:$0xff]
        %v288 = vld [vmem:[%s284 + $0x18] sm:$0xff]
        %v289 = vld [vmem:[%s279] sm:$0xff]
        %v290 = vld [vmem:[%s279 + $0x8] sm:$0xff]
        %v291 = vld [vmem:[%s279 + $0x10] sm:$0xff]
        %v292 = vld [vmem:[%s279 + $0x18] sm:$0xff]
        %vm293 = vcmask 261120
        %v295 = vsel %vm293, %v285, 0
        %v298 = vsel %vm293, %v286, 0
        %v301 = vsel %vm293, %v287, 0
        %v304 = vsel %vm293, %v288, 0
        %306 = vmatprep.subr.mxu0 0.0
        %307 = vmatpush1.msra.mxu0 %v289
        %308 = vmatprep.subr.mxu0 0.0
        %309 = vmatpush1.msra.mxu0 %v290
        %310 = vmatprep.subr.mxu0 0.0
        %311 = vmatpush1.msra.mxu0 %v291
        %312 = vmatprep.subr.mxu0 0.0
        %313 = vmatpush1.msra.mxu0 %v292
        %314 = vmatprep.subr.mxu0 0.0
        %315 = vmatpush1.msra.mxu0 0.0
        %316 = vmatprep.subr.mxu0 0.0
        %317 = vmatpush1.msra.mxu0 0.0
        %318 = vmatprep.subr.mxu0 0.0
        %319 = vmatpush1.msra.mxu0 0.0
        %320 = vmatprep.subr.mxu0 0.0
        %321 = vmatpush1.msra.mxu0 0.0
        %322 = vmatprep.subr.mxu0 0.0
        %323 = vmatpush1.msra.mxu0 0.0
        %324 = vmatprep.subr.mxu0 0.0
        %325 = vmatpush1.msra.mxu0 0.0
        %326 = vmatprep.subr.mxu0 0.0
        %327 = vmatpush1.msra.mxu0 0.0
        %328 = vmatprep.subr.mxu0 0.0
        %329 = vmatpush1.msra.mxu0 0.0
        %330 = vmatprep.subr.mxu0 0.0
        %331 = vmatpush1.msra.mxu0 0.0
        %332 = vmatprep.subr.mxu0 0.0
        %333 = vmatpush1.msra.mxu0 0.0
        %334 = vmatprep.subr.mxu0 0.0
        %335 = vmatpush1.msra.mxu0 0.0
        %336 = vmatprep.subr.mxu0 0.0
        %337 = vmatpush1.msra.mxu0 0.0
        %338 = vmatprep.subr.mxu0 0.0
        %339 = vmatpush1.msra.mxu0 0.0
        %340 = vmatprep.subr.mxu0 0.0
        %341 = vmatpush1.msra.mxu0 0.0
        %342 = vmatprep.subr.mxu0 0.0
        %343 = vmatpush1.msra.mxu0 0.0
        %344 = vmatprep.subr.mxu0 0.0
        %345 = vmatpush1.msra.mxu0 0.0
        %346 = vmatprep.subr.mxu0 0.0
        %347 = vmatpush1.msra.mxu0 0.0
        %348 = vmatprep.subr.mxu0 0.0
        %349 = vmatpush1.msra.mxu0 0.0
        %350 = vmatprep.subr.mxu0 0.0
        %351 = vmatpush1.msra.mxu0 0.0
        %352 = vmatprep.subr.mxu0 0.0
        %353 = vmatpush1.msra.mxu0 0.0
        %354 = vmatprep.subr.mxu0 0.0
        %355 = vmatpush1.msra.mxu0 0.0
        %356 = vmatprep.subr.mxu0 0.0
        %357 = vmatpush1.msra.mxu0 0.0
        %358 = vmatprep.subr.mxu0 0.0
        %359 = vmatpush1.msra.mxu0 0.0
        %360 = vmatprep.subr.mxu0 0.0
        %361 = vmatpush1.msra.mxu0 0.0
        %362 = vmatprep.subr.mxu0 0.0
        %363 = vmatpush1.msra.mxu0 0.0
        %364 = vmatprep.subr.mxu0 0.0
        %365 = vmatpush1.msra.mxu0 0.0
        %366 = vmatprep.subr.mxu0 0.0
        %367 = vmatpush1.msra.mxu0 0.0
        %368 = vmatprep.subr.mxu0 0.0
        %369 = vmatpush1.msra.mxu0 0.0
        %370 = vmatprep.mubr.f32.mxu0 0.0
        %371 = vmatmul.mubr.f32.gmra.mrb[0].mxu0 %v295
        %v372 = vpop.f32.mrb[0].mxu0
        %v373 = vadd.f32 0.0, %v372
        %v374 = vpop.f32.mrb[0].mxu0
        %375 = vmatprep.mubr.f32.mxu0 0.0
        %376 = vmatmul.mubr.f32.gmra.mrb[0].mxu0 %v298
        %v377 = vpop.f32.mrb[0].mxu0
        %v378 = vadd.f32 0.0, %v377
        %v379 = vpop.f32.mrb[0].mxu0
        %380 = vmatprep.mubr.f32.mxu0 0.0
        %381 = vmatmul.mubr.f32.gmra.mrb[0].mxu0 %v301
        %v382 = vpop.f32.mrb[0].mxu0
        %v383 = vadd.f32 0.0, %v382
        %v384 = vpop.f32.mrb[0].mxu0
        %385 = vmatprep.mubr.f32.mxu0 0.0
        %386 = vmatmul.mubr.f32.gmra.mrb[0].mxu0 %v304
        %v387 = vpop.f32.mrb[0].mxu0
        %v388 = vadd.f32 0.0, %v387
        %v389 = vpop.f32.mrb[0].mxu0
        %390 = vdwg.mxu0
        %v391 = vld [vmem:[%s2] sm:$0xff]
        %v392 = vld [vmem:[%s2 + $0x8] sm:$0xff]
        %v393 = vld [vmem:[%s2 + $0x10] sm:$0xff]
        %v394 = vld [vmem:[%s2 + $0x18] sm:$0xff]
        %v395 = vld [vmem:[%s3] sm:$0x3]
        %v397 = vlaneseq
        %v398 = vshrl.u32 %v397, 7
        %v399 = vsub.s32 0, %v398
        %v400 = vrot.slane %v395, %v399
        %v401 = vlaneseq
        %v402 = vshrl.u32 %v401, 7
        %v403 = vsub.s32 1, %v402
        %v404 = vrot.slane %v395, %v403
        %vm407 = vcmask 130048
        %v409 = vsel %vm407, %v373, 0
        %v412 = vsel %vm407, %v378, 0
        %v415 = vsel %vm407, %v383, 0
        %v418 = vsel %vm407, %v388, 0
        %420 = vmatprep.subr.mxu0 %v392
        %421 = vmatpush1.msra.mxu0 %v391
        %422 = vmatprep.subr.mxu0 %v394
        %423 = vmatpush1.msra.mxu0 %v393
        %424 = vmatprep.subr.mxu0 0.0
        %425 = vmatpush1.msra.mxu0 0.0
        %426 = vmatprep.subr.mxu0 0.0
        %427 = vmatpush1.msra.mxu0 0.0
        %428 = vmatprep.subr.mxu0 0.0
        %429 = vmatpush1.msra.mxu0 0.0
        %430 = vmatprep.subr.mxu0 0.0
        %431 = vmatpush1.msra.mxu0 0.0
        %432 = vmatprep.subr.mxu0 0.0
        %433 = vmatpush1.msra.mxu0 0.0
        %434 = vmatprep.subr.mxu0 0.0
        %435 = vmatpush1.msra.mxu0 0.0
        %436 = vmatprep.subr.mxu0 0.0
        %437 = vmatpush1.msra.mxu0 0.0
        %438 = vmatprep.subr.mxu0 0.0
        %439 = vmatpush1.msra.mxu0 0.0
        %440 = vmatprep.subr.mxu0 0.0
        %441 = vmatpush1.msra.mxu0 0.0
        %442 = vmatprep.subr.mxu0 0.0
        %443 = vmatpush1.msra.mxu0 0.0
        %444 = vmatprep.subr.mxu0 0.0
        %445 = vmatpush1.msra.mxu0 0.0
        %446 = vmatprep.subr.mxu0 0.0
        %447 = vmatpush1.msra.mxu0 0.0
        %448 = vmatprep.subr.mxu0 0.0
        %449 = vmatpush1.msra.mxu0 0.0
        %450 = vmatprep.subr.mxu0 0.0
        %451 = vmatpush1.msra.mxu0 0.0
        %452 = vmatprep.subr.mxu0 0.0
        %453 = vmatpush1.msra.mxu0 0.0
        %454 = vmatprep.subr.mxu0 0.0
        %455 = vmatpush1.msra.mxu0 0.0
        %456 = vmatprep.subr.mxu0 0.0
        %457 = vmatpush1.msra.mxu0 0.0
        %458 = vmatprep.subr.mxu0 0.0
        %459 = vmatpush1.msra.mxu0 0.0
        %460 = vmatprep.subr.mxu0 0.0
        %461 = vmatpush1.msra.mxu0 0.0
        %462 = vmatprep.subr.mxu0 0.0
        %463 = vmatpush1.msra.mxu0 0.0
        %464 = vmatprep.subr.mxu0 0.0
        %465 = vmatpush1.msra.mxu0 0.0
        %466 = vmatprep.subr.mxu0 0.0
        %467 = vmatpush1.msra.mxu0 0.0
        %468 = vmatprep.subr.mxu0 0.0
        %469 = vmatpush1.msra.mxu0 0.0
        %470 = vmatprep.subr.mxu0 0.0
        %471 = vmatpush1.msra.mxu0 0.0
        %472 = vmatprep.subr.mxu0 0.0
        %473 = vmatpush1.msra.mxu0 0.0
        %474 = vmatprep.subr.mxu0 0.0
        %475 = vmatpush1.msra.mxu0 0.0
        %476 = vmatprep.subr.mxu0 0.0
        %477 = vmatpush1.msra.mxu0 0.0
        %478 = vmatprep.subr.mxu0 0.0
        %479 = vmatpush1.msra.mxu0 0.0
        %480 = vmatprep.subr.mxu0 0.0
        %481 = vmatpush1.msra.mxu0 0.0
        %482 = vmatprep.subr.mxu0 0.0
        %483 = vmatpush1.msra.mxu0 0.0
        %484 = vmatprep.mubr.f32.mxu0 0.0
        %485 = vmatmul.mubr.f32.gmra.mrb[0].mxu0 %v409
        %v486 = vpop.f32.mrb[0].mxu0
        %v487 = vadd.f32 %v400, %v486
        %v488 = vpop.f32.mrb[0].mxu0
        %v489 = vadd.f32 %v404, %v488
        %490 = vmatprep.mubr.f32.mxu0 0.0
        %491 = vmatmul.mubr.f32.gmra.mrb[0].mxu0 %v412
        %v492 = vpop.f32.mrb[0].mxu0
        %v493 = vadd.f32 %v400, %v492
        %v494 = vpop.f32.mrb[0].mxu0
        %v495 = vadd.f32 %v404, %v494
        %496 = vmatprep.mubr.f32.mxu0 0.0
        %497 = vmatmul.mubr.f32.gmra.mrb[0].mxu0 %v415
        %v498 = vpop.f32.mrb[0].mxu0
        %v499 = vadd.f32 %v400, %v498
        %v500 = vpop.f32.mrb[0].mxu0
        %v501 = vadd.f32 %v404, %v500
        %502 = vmatprep.mubr.f32.mxu0 0.0
        %503 = vmatmul.mubr.f32.gmra.mrb[0].mxu0 %v418
        %v504 = vpop.f32.mrb[0].mxu0
        %v505 = vadd.f32 %v400, %v504
        %v506 = vpop.f32.mrb[0].mxu0
        %v507 = vadd.f32 %v404, %v506
        %508 = vdwg.mxu0
        %v509 = vmax.f32 %v487, 0.0
        %v510 = vmax.f32 %v489, 0.0
        %v511 = vmax.f32 %v493, 0.0
        %v512 = vmax.f32 %v495, 0.0
        %v513 = vmax.f32 %v499, 0.0
        %v514 = vmax.f32 %v501, 0.0
        %v515 = vmax.f32 %v505, 0.0
        %v516 = vmax.f32 %v507, 0.0
        %v517 = vadd.f32 %v509, %v511
        %v518 = vadd.f32 %v517, %v513
        %v519 = vadd.f32 %v518, %v515
        %v520 = vrot.slane %v519, 4
        %v521 = vadd.f32 %v519, %v520
        %v522 = vrot.slane %v521, 2
        %v523 = vadd.f32 %v521, %v522
        %v524 = vrot.slane %v523, 1
        %v525 = vadd.f32 %v523, %v524
        %v526 = vadd.f32 %v510, %v512
        %v527 = vadd.f32 %v526, %v514
        %v528 = vadd.f32 %v527, %v516
        %v529 = vrot.slane %v528, 4
        %v530 = vadd.f32 %v528, %v529
        %v531 = vrot.slane %v530, 2
        %v532 = vadd.f32 %v530, %v531
        %v533 = vrot.slane %v532, 1
        %v534 = vadd.f32 %v532, %v533
        %v535 = vrcp.pop 32.0
        %v536 = vmul.f32 %v525, %v535
        %v537 = vmul.f32 %v534, %v535
        %v538 = vsub.f32 %v509, %v536
        %v539 = vsub.f32 %v510, %v537
        %v540 = vsub.f32 %v511, %v536
        %v541 = vsub.f32 %v512, %v537
        %v542 = vsub.f32 %v513, %v536
        %v543 = vsub.f32 %v514, %v537
        %v544 = vsub.f32 %v515, %v536
        %v545 = vsub.f32 %v516, %v537
        %v546 = vmul.f32 %v538, %v538
        %v547 = vmul.f32 %v539, %v539
        %v548 = vmul.f32 %v540, %v540
        %v549 = vmul.f32 %v541, %v541
        %v550 = vmul.f32 %v542, %v542
        %v551 = vmul.f32 %v543, %v543
        %v552 = vmul.f32 %v544, %v544
        %v553 = vmul.f32 %v545, %v545
        %v554 = vadd.f32 %v546, %v548
        %v555 = vadd.f32 %v554, %v550
        %v556 = vadd.f32 %v555, %v552
        %v557 = vrot.slane %v556, 4
        %v558 = vadd.f32 %v556, %v557
        %v559 = vrot.slane %v558, 2
        %v560 = vadd.f32 %v558, %v559
        %v561 = vrot.slane %v560, 1
        %v562 = vadd.f32 %v560, %v561
        %v563 = vadd.f32 %v547, %v549
        %v564 = vadd.f32 %v563, %v551
        %v565 = vadd.f32 %v564, %v553
        %v566 = vrot.slane %v565, 4
        %v567 = vadd.f32 %v565, %v566
        %v568 = vrot.slane %v567, 2
        %v569 = vadd.f32 %v567, %v568
        %v570 = vrot.slane %v569, 1
        %v571 = vadd.f32 %v569, %v570
        %v572 = vmul.f32 %v562, %v535
        %v573 = vmul.f32 %v571, %v535
        %v574 = vadd.f32 %v572, 1e-05
        %v575 = vadd.f32 %v573, 1e-05
        %v576 = vrsqrt.pop %v574
        %v577 = vrsqrt.pop %v575
        %v578 = vmul.f32 %v538, %v576
        %v579 = vmul.f32 %v539, %v577
        %v580 = vmul.f32 %v540, %v576
        %v581 = vmul.f32 %v541, %v577
        %v582 = vmul.f32 %v542, %v576
        %v583 = vmul.f32 %v543, %v577
        %v584 = vmul.f32 %v544, %v576
        %v585 = vmul.f32 %v545, %v577
        %v586 = vld [vmem:[#allocation2] sm:$0xff]
        %v587 = vld [vmem:[#allocation2 + $0x8] sm:$0xff]
        %v588 = vld [vmem:[#allocation2 + $0x10] sm:$0xff]
        %v589 = vld [vmem:[#allocation2 + $0x18] sm:$0xff]
        %v590 = vld [vmem:[#allocation2 + $0x20] sm:$0xff]
        %v591 = vld [vmem:[#allocation2 + $0x28] sm:$0xff]
        %v592 = vld [vmem:[#allocation2 + $0x30] sm:$0xff]
        %v593 = vld [vmem:[#allocation2 + $0x38] sm:$0xff]
        %v594 = vld [vmem:[#allocation2 + $0x40] sm:$0xff]
        %v595 = vld [vmem:[#allocation2 + $0x48] sm:$0xff]
        %v596 = vld [vmem:[#allocation2 + $0x50] sm:$0xff]
        %v597 = vld [vmem:[#allocation2 + $0x58] sm:$0xff]
        %v598 = vld [vmem:[#allocation2 + $0x60] sm:$0xff]
        %v599 = vld [vmem:[#allocation2 + $0x68] sm:$0xff]
        %v600 = vld [vmem:[#allocation2 + $0x70] sm:$0xff]
        %v601 = vld [vmem:[#allocation2 + $0x78] sm:$0xff]
        %v602 = vld [vmem:[#allocation2 + $0x80] sm:$0xff]
        %v603 = vld [vmem:[#allocation2 + $0x88] sm:$0xff]
        %v604 = vld [vmem:[#allocation2 + $0x90] sm:$0xff]
        %v605 = vld [vmem:[#allocation2 + $0x98] sm:$0xff]
        %v606 = vld [vmem:[#allocation2 + $0xa0] sm:$0xff]
        %v607 = vld [vmem:[#allocation2 + $0xa8] sm:$0xff]
        %v608 = vld [vmem:[#allocation2 + $0xb0] sm:$0xff]
        %v609 = vld [vmem:[#allocation2 + $0xb8] sm:$0xff]
        %v610 = vld [vmem:[#allocation2 + $0xc0] sm:$0xff]
        %v611 = vld [vmem:[#allocation2 + $0xc8] sm:$0xff]
        %v612 = vld [vmem:[#allocation2 + $0xd0] sm:$0xff]
        %v613 = vld [vmem:[#allocation2 + $0xd8] sm:$0xff]
        %v614 = vld [vmem:[#allocation2 + $0xe0] sm:$0xff]
        %v615 = vld [vmem:[#allocation2 + $0xe8] sm:$0xff]
        %v616 = vld [vmem:[#allocation2 + $0xf0] sm:$0xff]
        %v617 = vld [vmem:[#allocation2 + $0xf8] sm:$0xff]
        %v618 = vld [vmem:[%s5] sm:$0x1]
        %v620 = vlaneseq
        %v621 = vshrl.u32 %v620, 7
        %v622 = vsub.s32 0, %v621
        %v623 = vrot.slane %v618, %v622
        %625 = vmatprep.subr.mxu0 0.0
        %626 = vmatpush1.msra.mxu0 %v586
        %627 = vmatprep.subr.mxu0 0.0
        %628 = vmatpush1.msra.mxu0 %v587
        %629 = vmatprep.subr.mxu0 0.0
        %630 = vmatpush1.msra.mxu0 %v588
        %631 = vmatprep.subr.mxu0 0.0
        %632 = vmatpush1.msra.mxu0 %v589
        %633 = vmatprep.subr.mxu0 0.0
        %634 = vmatpush1.msra.mxu0 %v590
        %635 = vmatprep.subr.mxu0 0.0
        %636 = vmatpush1.msra.mxu0 %v591
        %637 = vmatprep.subr.mxu0 0.0
        %638 = vmatpush1.msra.mxu0 %v592
        %639 = vmatprep.subr.mxu0 0.0
        %640 = vmatpush1.msra.mxu0 %v593
        %641 = vmatprep.subr.mxu0 0.0
        %642 = vmatpush1.msra.mxu0 %v594
        %643 = vmatprep.subr.mxu0 0.0
        %644 = vmatpush1.msra.mxu0 %v595
        %645 = vmatprep.subr.mxu0 0.0
        %646 = vmatpush1.msra.mxu0 %v596
        %647 = vmatprep.subr.mxu0 0.0
        %648 = vmatpush1.msra.mxu0 %v597
        %649 = vmatprep.subr.mxu0 0.0
        %650 = vmatpush1.msra.mxu0 %v598
        %651 = vmatprep.subr.mxu0 0.0
        %652 = vmatpush1.msra.mxu0 %v599
        %653 = vmatprep.subr.mxu0 0.0
        %654 = vmatpush1.msra.mxu0 %v600
        %655 = vmatprep.subr.mxu0 0.0
        %656 = vmatpush1.msra.mxu0 %v601
        %657 = vmatprep.subr.mxu0 0.0
        %658 = vmatpush1.msra.mxu0 %v602
        %659 = vmatprep.subr.mxu0 0.0
        %660 = vmatpush1.msra.mxu0 %v603
        %661 = vmatprep.subr.mxu0 0.0
        %662 = vmatpush1.msra.mxu0 %v604
        %663 = vmatprep.subr.mxu0 0.0
        %664 = vmatpush1.msra.mxu0 %v605
        %665 = vmatprep.subr.mxu0 0.0
        %666 = vmatpush1.msra.mxu0 %v606
        %667 = vmatprep.subr.mxu0 0.0
        %668 = vmatpush1.msra.mxu0 %v607
        %669 = vmatprep.subr.mxu0 0.0
        %670 = vmatpush1.msra.mxu0 %v608
        %671 = vmatprep.subr.mxu0 0.0
        %672 = vmatpush1.msra.mxu0 %v609
        %673 = vmatprep.subr.mxu0 0.0
        %674 = vmatpush1.msra.mxu0 %v610
        %675 = vmatprep.subr.mxu0 0.0
        %676 = vmatpush1.msra.mxu0 %v611
        %677 = vmatprep.subr.mxu0 0.0
        %678 = vmatpush1.msra.mxu0 %v612
        %679 = vmatprep.subr.mxu0 0.0
        %680 = vmatpush1.msra.mxu0 %v613
        %681 = vmatprep.subr.mxu0 0.0
        %682 = vmatpush1.msra.mxu0 %v614
        %683 = vmatprep.subr.mxu0 0.0
        %684 = vmatpush1.msra.mxu0 %v615
        %685 = vmatprep.subr.mxu0 0.0
        %686 = vmatpush1.msra.mxu0 %v616
        %687 = vmatprep.subr.mxu0 0.0
        %688 = vmatpush1.msra.mxu0 %v617
        %689 = vmatprep.mubr.f32.mxu0 %v579
        %690 = vmatmul.mubr.f32.gmra.mrb[0].mxu0 %v578
        %v691 = vpop.f32.mrb[0].mxu0
        %v692 = vadd.f32 %v623, %v691
        %v693 = vpop.f32.mrb[0].mxu0
        %694 = vmatprep.mubr.f32.mxu0 %v581
        %695 = vmatmul.mubr.f32.gmra.mrb[0].mxu0 %v580
        %v696 = vpop.f32.mrb[0].mxu0
        %v697 = vadd.f32 %v623, %v696
        %v698 = vpop.f32.mrb[0].mxu0
        %699 = vmatprep.mubr.f32.mxu0 %v583
        %700 = vmatmul.mubr.f32.gmra.mrb[0].mxu0 %v582
        %v701 = vpop.f32.mrb[0].mxu0
        %v702 = vadd.f32 %v623, %v701
        %v703 = vpop.f32.mrb[0].mxu0
        %704 = vmatprep.mubr.f32.mxu0 %v585
        %705 = vmatmul.mubr.f32.gmra.mrb[0].mxu0 %v584
        %v706 = vpop.f32.mrb[0].mxu0
        %v707 = vadd.f32 %v623, %v706
        %v708 = vpop.f32.mrb[0].mxu0
        %709 = vdwg.mxu0
        %v710 = vlaneseq
        %v711 = vand.u32 %v710, 127
        %vm712 = vcmp.lt.s32.totalorder %v711, 11
        %v713 = vsel %vm712, %v692, -inf
        %v714 = vsel %vm712, %v697, -inf
        %v715 = vsel %vm712, %v702, -inf
        %v716 = vsel %vm712, %v707, -inf
        %717 = vmax.xlane.f32.xlu0 %v713
        %v718 = vpop.xlane.xlu0 %717
        %719 = vmax.xlane.f32.xlu0 %v714
        %v720 = vpop.xlane.xlu0 %719
        %721 = vmax.xlane.f32.xlu0 %v715
        %v722 = vpop.xlane.xlu0 %721
        %723 = vmax.xlane.f32.xlu0 %v716
        %v724 = vpop.xlane.xlu0 %723
        %v725 = vsub.f32 %v692, %v718
        %v726 = vsub.f32 %v697, %v720
        %v727 = vsub.f32 %v702, %v722
        %v728 = vsub.f32 %v707, %v724
        %v729 = vmul.f32 %v725, 1.442695
        %v730 = vpow.pop %v729
        %v731 = vmul.f32 %v726, 1.442695
        %v732 = vpow.pop %v731
        %v733 = vmul.f32 %v727, 1.442695
        %v734 = vpow.pop %v733
        %v735 = vmul.f32 %v728, 1.442695
        %v736 = vpow.pop %v735
        %v737 = vsel %vm712, %v730, 0.0
        %v738 = vsel %vm712, %v732, 0.0
        %v739 = vsel %vm712, %v734, 0.0
        %v740 = vsel %vm712, %v736, 0.0
        %741 = vadd.xlane.f32.xlu0 %v737
        %v742 = vpop.xlane.xlu0 %741
        %743 = vadd.xlane.f32.xlu0 %v738
        %v744 = vpop.xlane.xlu0 %743
        %745 = vadd.xlane.f32.xlu0 %v739
        %v746 = vpop.xlane.xlu0 %745
        %747 = vadd.xlane.f32.xlu0 %v740
        %v748 = vpop.xlane.xlu0 %747
        %v749 = vlog2.pop %v742
        %v750 = vmul.f32 %v749, 0.6931472
        %v751 = vlog2.pop %v744
        %v752 = vmul.f32 %v751, 0.6931472
        %v753 = vlog2.pop %v746
        %v754 = vmul.f32 %v753, 0.6931472
        %v755 = vlog2.pop %v748
        %v756 = vmul.f32 %v755, 0.6931472
        %v757 = vsub.f32 %v725, %v750
        %v758 = vsub.f32 %v726, %v752
        %v759 = vsub.f32 %v727, %v754
        %v760 = vsub.f32 %v728, %v756
        %761 = vst [vmem:[%s274] sm:$0xff] %v757
        %762 = vst [vmem:[%s274 + $0x8] sm:$0xff] %v758
        %763 = vst [vmem:[%s274 + $0x10] sm:$0xff] %v759
        %764 = vst [vmem:[%s274 + $0x18] sm:$0xff] %v760
        %s765 = sand.u32 %s165, 1
        %s766 = scalar_lea.sflag [#allocation4], %s765
        %s767 = sand.u32 %s165, 1
        %s768 = smul.addr %s767, 32
        %s769 = scalar_lea.vmem [#allocation5], %s768
        // Predicated region
        $region49: #{tpu_custom_call.1} parent=43 // pred_check
          %p770 = pneg %p175
        $region50: #{tpu_custom_call.1} parent=43 // pred_check_branch
          %772 = sbr.rel (%p770) target = $region52
        $region51: #{tpu_custom_call.1} parent=43 // pred_region
          %s774 = ssub.s32 512, 512
          %775 = vsyncadd %s766, %s774
          %s776 = smul.addr %s21, 4
          %s777 = smul.addr %s776, 128
          %s778 = scalar_lea.hbm %s6, %s777
          %s779 = sshll.u32 %s769, 4
          %s780 = int_to_ptr.vmem [resolvable:$true] %s779
          %785 = dma.vmem_to_hbm [thread:$0]  %s780, 512, %s778, %s766, 128, 128, 8
        $region52: #{tpu_custom_call.1} parent=43 // pred_fallthru
          _
      $region44: #{tpu_custom_call.1} parent=5 // pred_fallthru
        _
      %p786 = scmp.le.s32.totalorder 2, %s16
      // Predicated region
      $region53: #{tpu_custom_call.1} parent=5 // pred_check
        %p787 = pneg %p786
      $region54: #{tpu_custom_call.1} parent=5 // pred_check_branch
        %789 = sbr.rel (%p787) target = $region56
      $region55: #{tpu_custom_call.1} parent=5 // pred_region
        %s790 = ssub.s32 %s16, 2
        // Predicated region
        $region57: #{tpu_custom_call.1} parent=55 // pred_check
          %p791 = pneg %p181
        $region58: #{tpu_custom_call.1} parent=55 // pred_check_branch
          %793 = sbr.rel (%p791) target = $region60
        $region59: #{tpu_custom_call.1} parent=55 // pred_region
          %s794 = sand.u32 %s166, 1
          %s795 = scalar_lea.sflag [#allocation4], %s794
          %s796 = sand.u32 %s166, 1
          %s797 = smul.addr %s796, 32
          %s798 = scalar_lea.vmem [#allocation5], %s797
          %799 = dma.done %s795, 512
        $region60: #{tpu_custom_call.1} parent=55 // pred_fallthru
          _
      $region56: #{tpu_custom_call.1} parent=5 // pred_fallthru
        _
    $region6: #{tpu_custom_call.1} parent=1 // loop_footer
      %s20 = sadd.s32 1, %s16
    $region7: #{tpu_custom_call.1} parent=1 // loop_footer_branch
      %15 = sbr.rel target = $region3
    $region8: #{tpu_custom_call.1} parent=1 // loop_exit
      _
    %800 = vsyncpa [#allocation3], 1
    %s801 = scalar_lea.sflag [#allocation3], 1
    %802 = vsyncpa %s801, 1
    %803 = vsyncpa [#allocation4], 1
    %s804 = scalar_lea.sflag [#allocation4], 1
    %805 = vsyncpa %s804, 1

</llo_original>
